<compile_context>
chip_gen: v5e
topology: v5e:2x2
jax: 0.10.0
libtpu: 0.0.40
codegen_flags: <defaults>
</compile_context>

<pallas_src>
import math

import jax
import jax.numpy as jnp
import numpy as np
from jax import lax
from jax.experimental import pallas as pl
from jax.experimental.pallas import tpu as pltpu

# ---------------------------------------------------------------------------
# Module configuration (consistent with PerceiverI.__init__) — used by main.
# ---------------------------------------------------------------------------
B = 2            # batch
S = 8            # sequence length of the kv inputs
KV_DIM = 32      # kv_dim
NUM_HEADS = 4
DIM_HEAD = 32
E = NUM_HEADS * DIM_HEAD    # query_dim = 128 (lane-dense last dim)
NQ = 8                      # num_queries
LN_EPS = 1e-5
NEG_BIG = -1e30             # additive mask value (finite stand-in for -inf)


# ---------------------------------------------------------------------------
# Fused kernel: Linear+LayerNorm -> q / fused k|v projections -> head-batched
# attention -> single full-width output projection.  grid=(1,): one launch,
# everything (<0.5 MiB) resident in VMEM for the whole call.
# ---------------------------------------------------------------------------
def _make_fused_kernel(b, s, nq, h, dh, compute_dtype):
    e = h * dh
    scale = 1.0 / math.sqrt(dh)

    def kernel(x_ref, lat_ref, mask_ref, wkv_ref, w_ref, bias_ref, o_ref):
        f32 = jnp.float32

        # ---- packed (1, E) vectors: a single (8, E) tile, a single DMA.
        bias_rows = bias_ref[...]
        kv_b = bias_rows[0:1, :]
        ln_g = bias_rows[1:2, :]
        ln_b = bias_rows[2:3, :]
        bq = bias_rows[3:4, :]
        bk = bias_rows[4:5, :]
        bv = bias_rows[5:6, :]
        bo = bias_rows[6:7, :]

        w = w_ref[...]                                   # (E, 4E) = [Wq|Wk|Wv|Wo]

        # ---- kv_layers: Linear(kv_dim -> E) + LayerNorm(E) on all b*s rows.
        x = x_ref[...].astype(compute_dtype)
        y = jnp.dot(x, wkv_ref[...], preferred_element_type=f32) + kv_b
        mean = jnp.mean(y, axis=-1, keepdims=True)
        cent = y - mean
        var = jnp.mean(cent * cent, axis=-1, keepdims=True)   # two-pass variance
        kv = cent * (lax.rsqrt(var + LN_EPS) * ln_g) + ln_b   # (b*s, E) fp32
        kv_c = kv.astype(compute_dtype)

        # ---- batch-invariant q projection, computed once, pre-scaled.
        q = (jnp.dot(lat_ref[...], w[:, :e], preferred_element_type=f32)
             + bq) * scale                                     # (nq, E) fp32

        # ---- fused k|v projection: ONE (b*s, 2E) matmul, split at lane 128.
        kvp = jnp.dot(kv_c, w[:, e:3 * e], preferred_element_type=f32)
        k = kvp[:, :e] + bk                                    # (b*s, E) fp32
        v = kvp[:, e:] + bv                                    # (b*s, E) fp32

        # ---- repack into head-major batched operands (static slices, done
        #      exactly once; no per-head compute loop remains).
        q_heads = [q[:, hi * dh:(hi + 1) * dh] for hi in range(h)]
        q_bh = jnp.stack(q_heads * b, axis=0).astype(compute_dtype)   # (b*h,nq,dh)
        k_bh = jnp.stack(
            [k[bi * s:(bi + 1) * s, hi * dh:(hi + 1) * dh]
             for bi in range(b) for hi in range(h)],
            axis=0).astype(compute_dtype)                      # (b*h, s, dh)
        v_bh = jnp.stack(
            [v[bi * s:(bi + 1) * s, hi * dh:(hi + 1) * dh]
             for bi in range(b) for hi in range(h)],
            axis=0).astype(compute_dtype)                      # (b*h, s, dh)

        # additive key-padding bias (nonzero == ignore), built once.
        neg = jnp.where(mask_ref[...] != 0, NEG_BIG, 0.0).astype(f32)  # (b, s)
        bias_bh = jnp.stack(
            [neg[bi:bi + 1, :] for bi in range(b) for _ in range(h)],
            axis=0)                                            # (b*h, 1, s)

        # ---- attention: two batched einsums over the fused g = b*h axis.
        # NOTE: a fully-masked row yields uniform attention over padded keys
        # (finite NEG_BIG) — matches the JAX reference, not PyTorch's NaNs.
        # At larger S/H, pack H*S score columns into one lane-dense tile to
        # raise VPU/XLU lane occupancy of the softmax (not worth it at S=8).
        scores = jnp.einsum('gqd,gkd->gqk', q_bh, k_bh,
                            preferred_element_type=f32) + bias_bh  # (b*h,nq,s)
        scores = scores - jnp.max(scores, axis=-1, keepdims=True)
        p = jnp.exp(scores)
        p = p * pl.reciprocal(jnp.sum(p, axis=-1, keepdims=True), approx=True)
        pv = jnp.einsum('gqk,gkd->gqd', p.astype(compute_dtype), v_bh,
                        preferred_element_type=f32)            # (b*h, nq, dh)

        # ---- single full-width output projection over all b*nq rows.
        ctx = jnp.concatenate(
            [jnp.concatenate([pv[bi * h + hi] for hi in range(h)], axis=-1)
             for bi in range(b)], axis=0)                      # (b*nq, E) fp32
        out = jnp.dot(ctx.astype(compute_dtype), w[:, 3 * e:],
                      preferred_element_type=f32) + bo         # (b*nq, E)
        o_ref[...] = out.reshape(b, nq, e).astype(o_ref.dtype)

    return kernel


# ---------------------------------------------------------------------------
# One-time parameter packing / casting (init-time, NOT per forward call).
# ---------------------------------------------------------------------------
def prepare_params(params, compute_dtype=jnp.float32):
    e = params["wq"].shape[0]
    w_qkvo = jnp.concatenate(
        [params["wq"], params["wk"], params["wv"], params["wo"]], axis=1)
    biases = jnp.concatenate(
        [params["kv_b"], params["ln_g"], params["ln_b"], params["bq"],
         params["bk"], params["bv"], params["bo"],
         jnp.zeros((1, e), jnp.float32)], axis=0)               # (8, E) one tile
    return {
        "latents": params["latents"].astype(compute_dtype),     # (NQ, E)
        "w_kv": params["kv_w"].astype(compute_dtype),           # (KV_DIM, E)
        "w_qkvo": w_qkvo.astype(compute_dtype),                 # (E, 4E)
        "biases": biases.astype(jnp.float32),                   # (8, E) fp32
    }


def perceiver_forward(prepped, inputs, key_padding_mask, num_heads=NUM_HEADS):
    b, s, kv_dim = inputs.shape
    nq, e = prepped["latents"].shape
    h = num_heads
    dh = e // h
    assert h * dh == e
    assert prepped["w_kv"].shape == (kv_dim, e)
    assert prepped["w_qkvo"].shape == (e, 4 * e)
    assert key_padding_mask.shape == (b, s)
    compute_dtype = prepped["w_qkvo"].dtype

    x_flat = inputs.reshape(b * s, kv_dim)          # reshape only, no dtype cast
    mask_i32 = (key_padding_mask if key_padding_mask.dtype == jnp.int32
                else key_padding_mask.astype(jnp.int32))

    def full(shape):
        return pl.BlockSpec(shape, lambda i: (0,) * len(shape))

    return pl.pallas_call(
        _make_fused_kernel(b, s, nq, h, dh, compute_dtype),
        out_shape=jax.ShapeDtypeStruct((b, nq, e), jnp.float32),
        grid_spec=pltpu.PrefetchScalarGridSpec(
            num_scalar_prefetch=0,
            grid=(1,),                                # single launch; see header
            in_specs=[
                full((b * s, kv_dim)),                # x (flattened, fp32)
                full((nq, e)),                        # latents (compute dtype)
                full((b, s)),                         # key-padding mask (int32)
                full((kv_dim, e)),                    # W_kv (compute dtype)
                full((e, 4 * e)),                     # [Wq|Wk|Wv|Wo] slab
                full((8, e)),                         # packed biases (fp32)
            ],
            out_specs=pl.BlockSpec((b, nq, e), lambda i: (0, 0, 0)),
        ),
        compiler_params=pltpu.CompilerParams(
            dimension_semantics=("arbitrary",)),
    )(x_flat, prepped["latents"], mask_i32, prepped["w_kv"],
      prepped["w_qkvo"], prepped["biases"])


# ---------------------------------------------------------------------------
# Pure-JAX reference (mirrors the PyTorch module) for the sanity check.
# ---------------------------------------------------------------------------
def perceiver_reference(params, inputs, key_padding_mask):
    b = inputs.shape[0]
    y = inputs.reshape(b * S, KV_DIM) @ params["kv_w"] + params["kv_b"]
    mean = jnp.mean(y, axis=-1, keepdims=True)
    var = jnp.mean((y - mean) ** 2, axis=-1, keepdims=True)
    y = (y - mean) / jnp.sqrt(var + LN_EPS) * params["ln_g"] + params["ln_b"]
    kv = y.reshape(b, S, E)

    q = params["latents"] @ params["wq"] + params["bq"]          # (NQ, E)
    k = kv @ params["wk"] + params["bk"]                         # (B, S, E)
    v = kv @ params["wv"] + params["bv"]

    qh = q.reshape(NQ, NUM_HEADS, DIM_HEAD)
    kh = k.reshape(b, S, NUM_HEADS, DIM_HEAD)
    vh = v.reshape(b, S, NUM_HEADS, DIM_HEAD)
    scores = jnp.einsum("qhd,bkhd->bhqk", qh, kh) / math.sqrt(DIM_HEAD)
    scores = scores + jnp.where(key_padding_mask, NEG_BIG,
                                0.0)[:, None, None, :]
    p = jax.nn.softmax(scores, axis=-1)
    o = jnp.einsum("bhqk,bkhd->bqhd", p, vh).reshape(b, NQ, E)
    return o @ params["wo"] + params["bo"]


def init_params(key):
    ks = jax.random.split(key, 8)
    def rnd(k, shape, scale=0.05):
        return (scale * jax.random.normal(k, shape)).astype(jnp.float32)
    return {
        "latents": jax.random.normal(ks[0], (NQ, E)).astype(jnp.float32),
        "kv_w": rnd(ks[1], (KV_DIM, E)),
        "kv_b": jnp.zeros((1, E), jnp.float32),
        "ln_g": jnp.ones((1, E), jnp.float32),
        "ln_b": jnp.zeros((1, E), jnp.float32),
        "wq": rnd(ks[2], (E, E)),
        "bq": rnd(ks[3], (1, E)),
        "wk": rnd(ks[4], (E, E)),
        "bk": jnp.zeros((1, E), jnp.float32),
        "wv": rnd(ks[5], (E, E)),
        "bv": jnp.zeros((1, E), jnp.float32),
        "wo": rnd(ks[6], (E, E)),
        "bo": rnd(ks[7], (1, E)),
    }


if __name__ == "__main__":
    key = jax.random.PRNGKey(0)
    pkey, xkey = jax.random.split(key)
    params = init_params(pkey)

    inputs = jax.random.normal(xkey, (B, S, KV_DIM)).astype(jnp.float32)
    # key_padding_mask: True == padded/ignored (PyTorch convention);
    # pad out the last two positions of every sequence.
    key_padding_mask = jnp.array(
        [[False] * (S - 2) + [True, True]] * B, dtype=bool)

    ref = perceiver_reference(params, inputs, key_padding_mask)

    # fp32 MXU-operand path (tight check against the fp32 reference;
    # tolerance leaves room for the approx EUP reciprocal in the softmax).
    prepped_f32 = prepare_params(params, jnp.float32)
    out_f32 = jax.block_until_ready(
        perceiver_forward(prepped_f32, inputs, key_padding_mask))
    np.testing.assert_allclose(np.asarray(out_f32), np.asarray(ref),
                               rtol=2e-3, atol=2e-3)

    # bf16 MXU-operand path (native on v5e/v6e/v7x; LN / softmax stats /
    # accumulation stay fp32), compared with a looser tolerance.
    prepped_bf16 = prepare_params(params, jnp.bfloat16)
    out_bf16 = jax.block_until_ready(
        perceiver_forward(prepped_bf16, inputs, key_padding_mask))
    np.testing.assert_allclose(np.asarray(out_bf16), np.asarray(ref),
                               rtol=5e-2, atol=5e-2)

    assert out_f32.shape == (B, NQ, E)
    print("KERNEL_OK")
</pallas_src>

<mosaic_0001>
module attributes {stable_mosaic.version = 11 : i64} {
  func.func @kernel(%arg0: i32, %arg1: memref<16x32xf32, #tpu.memory_space<vmem>>, %arg2: memref<8x128xf32, #tpu.memory_space<vmem>>, %arg3: memref<2x8xi32, #tpu.memory_space<vmem>>, %arg4: memref<32x128xf32, #tpu.memory_space<vmem>>, %arg5: memref<128x512xf32, #tpu.memory_space<vmem>>, %arg6: memref<8x128xf32, #tpu.memory_space<vmem>>, %arg7: memref<2x8x128xf32, #tpu.memory_space<vmem>>) attributes {dimension_semantics = [#tpu.dimension_semantics<arbitrary>], iteration_bounds = array<i64: 1>, scalar_prefetch = 0 : i64, scratch_operands = 0 : i64, tpu.core_type = #tpu.core_type<tc>, window_params = [{pipeline_mode = #tpu.pipeline_mode<synchronous>, transform_indices = @transform_0, window_bounds = array<i64: 16, 32>}, {pipeline_mode = #tpu.pipeline_mode<synchronous>, transform_indices = @transform_1, window_bounds = array<i64: 8, 128>}, {pipeline_mode = #tpu.pipeline_mode<synchronous>, transform_indices = @transform_2, window_bounds = array<i64: 2, 8>}, {pipeline_mode = #tpu.pipeline_mode<synchronous>, transform_indices = @transform_3, window_bounds = array<i64: 32, 128>}, {pipeline_mode = #tpu.pipeline_mode<synchronous>, transform_indices = @transform_4, window_bounds = array<i64: 128, 512>}, {pipeline_mode = #tpu.pipeline_mode<synchronous>, transform_indices = @transform_5, window_bounds = array<i64: 8, 128>}, {pipeline_mode = #tpu.pipeline_mode<synchronous>, transform_indices = @transform_6, window_bounds = array<i64: 2, 8, 128>}]} {
    %c0 = arith.constant 0 : index
    %c0_0 = arith.constant 0 : index
    %0 = vector.load %arg6[%c0, %c0_0] : memref<8x128xf32, #tpu.memory_space<vmem>>, vector<8x128xf32>
    %1 = vector.extract_strided_slice %0 {offsets = [0, 0], sizes = [1, 128], strides = [1, 1]} : vector<8x128xf32> to vector<1x128xf32>
    %2 = vector.extract_strided_slice %0 {offsets = [1, 0], sizes = [1, 128], strides = [1, 1]} : vector<8x128xf32> to vector<1x128xf32>
    %3 = vector.extract_strided_slice %0 {offsets = [2, 0], sizes = [1, 128], strides = [1, 1]} : vector<8x128xf32> to vector<1x128xf32>
    %4 = vector.extract_strided_slice %0 {offsets = [3, 0], sizes = [1, 128], strides = [1, 1]} : vector<8x128xf32> to vector<1x128xf32>
    %5 = vector.extract_strided_slice %0 {offsets = [4, 0], sizes = [1, 128], strides = [1, 1]} : vector<8x128xf32> to vector<1x128xf32>
    %6 = vector.extract_strided_slice %0 {offsets = [5, 0], sizes = [1, 128], strides = [1, 1]} : vector<8x128xf32> to vector<1x128xf32>
    %7 = vector.extract_strided_slice %0 {offsets = [6, 0], sizes = [1, 128], strides = [1, 1]} : vector<8x128xf32> to vector<1x128xf32>
    %c0_1 = arith.constant 0 : index
    %c0_2 = arith.constant 0 : index
    %8 = vector.load %arg5[%c0_1, %c0_2] : memref<128x512xf32, #tpu.memory_space<vmem>>, vector<128x512xf32>
    %c0_3 = arith.constant 0 : index
    %c0_4 = arith.constant 0 : index
    %9 = vector.load %arg1[%c0_3, %c0_4] : memref<16x32xf32, #tpu.memory_space<vmem>>, vector<16x32xf32>
    %c0_5 = arith.constant 0 : index
    %c0_6 = arith.constant 0 : index
    %10 = vector.load %arg4[%c0_5, %c0_6] : memref<32x128xf32, #tpu.memory_space<vmem>>, vector<32x128xf32>
    %cst = arith.constant dense<0.000000e+00> : vector<16x128xf32>
    %11 = tpu.matmul %9, %10, %cst {dimension_numbers = #tpu.dot_dimension_numbers<[1], [0], [0], [1], [0, 0, 1, 1], [], []>} : vector<16x32xf32>, vector<32x128xf32>, vector<16x128xf32> -> vector<16x128xf32>
    %12 = vector.broadcast %1 : vector<1x128xf32> to vector<16x128xf32>
    %13 = arith.addf %11, %12 : vector<16x128xf32>
    %cst_7 = arith.constant dense<0.000000e+00> : vector<16xf32>
    %14 = vector.multi_reduction <add>, %13, %cst_7 [1] : vector<16x128xf32> to vector<16xf32>
    %15 = vector.shape_cast %14 : vector<16xf32> to vector<16x1xf32>
    %cst_8 = arith.constant 1.280000e+02 : f32
    %16 = vector.broadcast %cst_8 : f32 to vector<16x1xf32>
    %17 = arith.divf %15, %16 : vector<16x1xf32>
    %18 = vector.broadcast %17 : vector<16x1xf32> to vector<16x128xf32>
    %19 = arith.subf %13, %18 : vector<16x128xf32>
    %20 = arith.mulf %19, %19 : vector<16x128xf32>
    %cst_9 = arith.constant dense<0.000000e+00> : vector<16xf32>
    %21 = vector.multi_reduction <add>, %20, %cst_9 [1] : vector<16x128xf32> to vector<16xf32>
    %22 = vector.shape_cast %21 : vector<16xf32> to vector<16x1xf32>
    %cst_10 = arith.constant 1.280000e+02 : f32
    %23 = vector.broadcast %cst_10 : f32 to vector<16x1xf32>
    %24 = arith.divf %22, %23 : vector<16x1xf32>
    %cst_11 = arith.constant 9.99999974E-6 : f32
    %25 = vector.broadcast %cst_11 : f32 to vector<16x1xf32>
    %26 = arith.addf %24, %25 : vector<16x1xf32>
    %27 = math.rsqrt %26 : vector<16x1xf32>
    %28 = vector.broadcast %27 : vector<16x1xf32> to vector<16x128xf32>
    %29 = vector.broadcast %2 : vector<1x128xf32> to vector<16x128xf32>
    %30 = arith.mulf %28, %29 : vector<16x128xf32>
    %31 = arith.mulf %19, %30 : vector<16x128xf32>
    %32 = vector.broadcast %3 : vector<1x128xf32> to vector<16x128xf32>
    %33 = arith.addf %31, %32 : vector<16x128xf32>
    %c0_12 = arith.constant 0 : index
    %c0_13 = arith.constant 0 : index
    %34 = vector.load %arg2[%c0_12, %c0_13] : memref<8x128xf32, #tpu.memory_space<vmem>>, vector<8x128xf32>
    %35 = vector.extract_strided_slice %8 {offsets = [0, 0], sizes = [128, 128], strides = [1, 1]} : vector<128x512xf32> to vector<128x128xf32>
    %cst_14 = arith.constant dense<0.000000e+00> : vector<8x128xf32>
    %36 = tpu.matmul %34, %35, %cst_14 {dimension_numbers = #tpu.dot_dimension_numbers<[1], [0], [0], [1], [0, 0, 1, 1], [], []>} : vector<8x128xf32>, vector<128x128xf32>, vector<8x128xf32> -> vector<8x128xf32>
    %37 = vector.broadcast %4 : vector<1x128xf32> to vector<8x128xf32>
    %38 = arith.addf %36, %37 : vector<8x128xf32>
    %cst_15 = arith.constant 0.176776692 : f32
    %39 = vector.broadcast %cst_15 : f32 to vector<8x128xf32>
    %40 = arith.mulf %38, %39 : vector<8x128xf32>
    %41 = vector.extract_strided_slice %8 {offsets = [0, 128], sizes = [128, 256], strides = [1, 1]} : vector<128x512xf32> to vector<128x256xf32>
    %cst_16 = arith.constant dense<0.000000e+00> : vector<16x256xf32>
    %42 = tpu.matmul %33, %41, %cst_16 {dimension_numbers = #tpu.dot_dimension_numbers<[1], [0], [0], [1], [0, 0, 1, 1], [], []>} : vector<16x128xf32>, vector<128x256xf32>, vector<16x256xf32> -> vector<16x256xf32>
    %43 = vector.extract_strided_slice %42 {offsets = [0, 0], sizes = [16, 128], strides = [1, 1]} : vector<16x256xf32> to vector<16x128xf32>
    %44 = vector.broadcast %5 : vector<1x128xf32> to vector<16x128xf32>
    %45 = arith.addf %43, %44 : vector<16x128xf32>
    %46 = vector.extract_strided_slice %42 {offsets = [0, 128], sizes = [16, 128], strides = [1, 1]} : vector<16x256xf32> to vector<16x128xf32>
    %47 = vector.broadcast %6 : vector<1x128xf32> to vector<16x128xf32>
    %48 = arith.addf %46, %47 : vector<16x128xf32>
    %49 = vector.extract_strided_slice %40 {offsets = [0, 0], sizes = [8, 32], strides = [1, 1]} : vector<8x128xf32> to vector<8x32xf32>
    %50 = vector.extract_strided_slice %40 {offsets = [0, 32], sizes = [8, 32], strides = [1, 1]} : vector<8x128xf32> to vector<8x32xf32>
    %51 = vector.extract_strided_slice %40 {offsets = [0, 64], sizes = [8, 32], strides = [1, 1]} : vector<8x128xf32> to vector<8x32xf32>
    %52 = vector.extract_strided_slice %40 {offsets = [0, 96], sizes = [8, 32], strides = [1, 1]} : vector<8x128xf32> to vector<8x32xf32>
    %53 = vector.shape_cast %49 : vector<8x32xf32> to vector<1x8x32xf32>
    %54 = vector.shape_cast %50 : vector<8x32xf32> to vector<1x8x32xf32>
    %55 = vector.shape_cast %51 : vector<8x32xf32> to vector<1x8x32xf32>
    %56 = vector.shape_cast %52 : vector<8x32xf32> to vector<1x8x32xf32>
    %57 = vector.shape_cast %49 : vector<8x32xf32> to vector<1x8x32xf32>
    %58 = vector.shape_cast %50 : vector<8x32xf32> to vector<1x8x32xf32>
    %59 = vector.shape_cast %51 : vector<8x32xf32> to vector<1x8x32xf32>
    %60 = vector.shape_cast %52 : vector<8x32xf32> to vector<1x8x32xf32>
    %61 = tpu.concatenate %53, %54, %55, %56, %57, %58, %59, %60 in 0 : vector<1x8x32xf32>, vector<1x8x32xf32>, vector<1x8x32xf32>, vector<1x8x32xf32>, vector<1x8x32xf32>, vector<1x8x32xf32>, vector<1x8x32xf32>, vector<1x8x32xf32> -> vector<8x8x32xf32>
    %62 = vector.extract_strided_slice %45 {offsets = [0, 0], sizes = [8, 32], strides = [1, 1]} : vector<16x128xf32> to vector<8x32xf32>
    %63 = vector.extract_strided_slice %45 {offsets = [0, 32], sizes = [8, 32], strides = [1, 1]} : vector<16x128xf32> to vector<8x32xf32>
    %64 = vector.extract_strided_slice %45 {offsets = [0, 64], sizes = [8, 32], strides = [1, 1]} : vector<16x128xf32> to vector<8x32xf32>
    %65 = vector.extract_strided_slice %45 {offsets = [0, 96], sizes = [8, 32], strides = [1, 1]} : vector<16x128xf32> to vector<8x32xf32>
    %66 = vector.extract_strided_slice %45 {offsets = [8, 0], sizes = [8, 32], strides = [1, 1]} : vector<16x128xf32> to vector<8x32xf32>
    %67 = vector.extract_strided_slice %45 {offsets = [8, 32], sizes = [8, 32], strides = [1, 1]} : vector<16x128xf32> to vector<8x32xf32>
    %68 = vector.extract_strided_slice %45 {offsets = [8, 64], sizes = [8, 32], strides = [1, 1]} : vector<16x128xf32> to vector<8x32xf32>
    %69 = vector.extract_strided_slice %45 {offsets = [8, 96], sizes = [8, 32], strides = [1, 1]} : vector<16x128xf32> to vector<8x32xf32>
    %70 = vector.shape_cast %62 : vector<8x32xf32> to vector<1x8x32xf32>
    %71 = vector.shape_cast %63 : vector<8x32xf32> to vector<1x8x32xf32>
    %72 = vector.shape_cast %64 : vector<8x32xf32> to vector<1x8x32xf32>
    %73 = vector.shape_cast %65 : vector<8x32xf32> to vector<1x8x32xf32>
    %74 = vector.shape_cast %66 : vector<8x32xf32> to vector<1x8x32xf32>
    %75 = vector.shape_cast %67 : vector<8x32xf32> to vector<1x8x32xf32>
    %76 = vector.shape_cast %68 : vector<8x32xf32> to vector<1x8x32xf32>
    %77 = vector.shape_cast %69 : vector<8x32xf32> to vector<1x8x32xf32>
    %78 = tpu.concatenate %70, %71, %72, %73, %74, %75, %76, %77 in 0 : vector<1x8x32xf32>, vector<1x8x32xf32>, vector<1x8x32xf32>, vector<1x8x32xf32>, vector<1x8x32xf32>, vector<1x8x32xf32>, vector<1x8x32xf32>, vector<1x8x32xf32> -> vector<8x8x32xf32>
    %79 = vector.extract_strided_slice %48 {offsets = [0, 0], sizes = [8, 32], strides = [1, 1]} : vector<16x128xf32> to vector<8x32xf32>
    %80 = vector.extract_strided_slice %48 {offsets = [0, 32], sizes = [8, 32], strides = [1, 1]} : vector<16x128xf32> to vector<8x32xf32>
    %81 = vector.extract_strided_slice %48 {offsets = [0, 64], sizes = [8, 32], strides = [1, 1]} : vector<16x128xf32> to vector<8x32xf32>
    %82 = vector.extract_strided_slice %48 {offsets = [0, 96], sizes = [8, 32], strides = [1, 1]} : vector<16x128xf32> to vector<8x32xf32>
    %83 = vector.extract_strided_slice %48 {offsets = [8, 0], sizes = [8, 32], strides = [1, 1]} : vector<16x128xf32> to vector<8x32xf32>
    %84 = vector.extract_strided_slice %48 {offsets = [8, 32], sizes = [8, 32], strides = [1, 1]} : vector<16x128xf32> to vector<8x32xf32>
    %85 = vector.extract_strided_slice %48 {offsets = [8, 64], sizes = [8, 32], strides = [1, 1]} : vector<16x128xf32> to vector<8x32xf32>
    %86 = vector.extract_strided_slice %48 {offsets = [8, 96], sizes = [8, 32], strides = [1, 1]} : vector<16x128xf32> to vector<8x32xf32>
    %87 = vector.shape_cast %79 : vector<8x32xf32> to vector<1x8x32xf32>
    %88 = vector.shape_cast %80 : vector<8x32xf32> to vector<1x8x32xf32>
    %89 = vector.shape_cast %81 : vector<8x32xf32> to vector<1x8x32xf32>
    %90 = vector.shape_cast %82 : vector<8x32xf32> to vector<1x8x32xf32>
    %91 = vector.shape_cast %83 : vector<8x32xf32> to vector<1x8x32xf32>
    %92 = vector.shape_cast %84 : vector<8x32xf32> to vector<1x8x32xf32>
    %93 = vector.shape_cast %85 : vector<8x32xf32> to vector<1x8x32xf32>
    %94 = vector.shape_cast %86 : vector<8x32xf32> to vector<1x8x32xf32>
    %95 = tpu.concatenate %87, %88, %89, %90, %91, %92, %93, %94 in 0 : vector<1x8x32xf32>, vector<1x8x32xf32>, vector<1x8x32xf32>, vector<1x8x32xf32>, vector<1x8x32xf32>, vector<1x8x32xf32>, vector<1x8x32xf32>, vector<1x8x32xf32> -> vector<8x8x32xf32>
    %c0_17 = arith.constant 0 : index
    %c0_18 = arith.constant 0 : index
    %96 = vector.load %arg3[%c0_17, %c0_18] : memref<2x8xi32, #tpu.memory_space<vmem>>, vector<2x8xi32>
    %c0_i32 = arith.constant 0 : i32
    %97 = vector.broadcast %c0_i32 : i32 to vector<2x8xi32>
    %98 = arith.cmpi ne, %96, %97 : vector<2x8xi32>
    %cst_19 = arith.constant -1.000000e+30 : f32
    %cst_20 = arith.constant 0.000000e+00 : f32
    %99 = vector.broadcast %cst_19 : f32 to vector<2x8xf32>
    %100 = vector.broadcast %cst_20 : f32 to vector<2x8xf32>
    %101 = arith.select %98, %99, %100 : vector<2x8xi1>, vector<2x8xf32>
    %102 = vector.extract_strided_slice %101 {offsets = [0, 0], sizes = [1, 8], strides = [1, 1]} : vector<2x8xf32> to vector<1x8xf32>
    %103 = vector.extract_strided_slice %101 {offsets = [0, 0], sizes = [1, 8], strides = [1, 1]} : vector<2x8xf32> to vector<1x8xf32>
    %104 = vector.extract_strided_slice %101 {offsets = [0, 0], sizes = [1, 8], strides = [1, 1]} : vector<2x8xf32> to vector<1x8xf32>
    %105 = vector.extract_strided_slice %101 {offsets = [0, 0], sizes = [1, 8], strides = [1, 1]} : vector<2x8xf32> to vector<1x8xf32>
    %106 = vector.extract_strided_slice %101 {offsets = [1, 0], sizes = [1, 8], strides = [1, 1]} : vector<2x8xf32> to vector<1x8xf32>
    %107 = vector.extract_strided_slice %101 {offsets = [1, 0], sizes = [1, 8], strides = [1, 1]} : vector<2x8xf32> to vector<1x8xf32>
    %108 = vector.extract_strided_slice %101 {offsets = [1, 0], sizes = [1, 8], strides = [1, 1]} : vector<2x8xf32> to vector<1x8xf32>
    %109 = vector.extract_strided_slice %101 {offsets = [1, 0], sizes = [1, 8], strides = [1, 1]} : vector<2x8xf32> to vector<1x8xf32>
    %110 = vector.shape_cast %102 : vector<1x8xf32> to vector<1x1x8xf32>
    %111 = vector.shape_cast %103 : vector<1x8xf32> to vector<1x1x8xf32>
    %112 = vector.shape_cast %104 : vector<1x8xf32> to vector<1x1x8xf32>
    %113 = vector.shape_cast %105 : vector<1x8xf32> to vector<1x1x8xf32>
    %114 = vector.shape_cast %106 : vector<1x8xf32> to vector<1x1x8xf32>
    %115 = vector.shape_cast %107 : vector<1x8xf32> to vector<1x1x8xf32>
    %116 = vector.shape_cast %108 : vector<1x8xf32> to vector<1x1x8xf32>
    %117 = vector.shape_cast %109 : vector<1x8xf32> to vector<1x1x8xf32>
    %118 = tpu.concatenate %110, %111, %112, %113, %114, %115, %116, %117 in 0 : vector<1x1x8xf32>, vector<1x1x8xf32>, vector<1x1x8xf32>, vector<1x1x8xf32>, vector<1x1x8xf32>, vector<1x1x8xf32>, vector<1x1x8xf32>, vector<1x1x8xf32> -> vector<8x1x8xf32>
    "tpu.trace_start"() <{level = 10 : i32, message = "gqd,gkd->gqk"}> : () -> ()
    %cst_21 = arith.constant dense<0.000000e+00> : vector<8x8x8xf32>
    %119 = tpu.matmul %61, %78, %cst_21 {dimension_numbers = #tpu.dot_dimension_numbers<[2], [2], [1], [1], [0, 0, 0, 1, 1, 1], [0], [0]>} : vector<8x8x32xf32>, vector<8x8x32xf32>, vector<8x8x8xf32> -> vector<8x8x8xf32>
    "tpu.trace_stop"() : () -> ()
    %120 = vector.broadcast %118 : vector<8x1x8xf32> to vector<8x8x8xf32>
    %121 = arith.addf %119, %120 : vector<8x8x8xf32>
    %cst_22 = arith.constant dense<0xFF800000> : vector<8x8xf32>
    %122 = vector.multi_reduction <maximumf>, %121, %cst_22 [2] : vector<8x8x8xf32> to vector<8x8xf32>
    %123 = vector.shape_cast %122 : vector<8x8xf32> to vector<8x8x1xf32>
    %124 = vector.broadcast %123 : vector<8x8x1xf32> to vector<8x8x8xf32>
    %125 = arith.subf %121, %124 : vector<8x8x8xf32>
    %126 = math.exp %125 : vector<8x8x8xf32>
    %cst_23 = arith.constant dense<0.000000e+00> : vector<8x8xf32>
    %127 = vector.multi_reduction <add>, %126, %cst_23 [2] : vector<8x8x8xf32> to vector<8x8xf32>
    %128 = vector.shape_cast %127 : vector<8x8xf32> to vector<8x8x1xf32>
    %129 = tpu.reciprocal %128 {approx = true} : vector<8x8x1xf32> -> vector<8x8x1xf32>
    %130 = vector.broadcast %129 : vector<8x8x1xf32> to vector<8x8x8xf32>
    %131 = arith.mulf %126, %130 : vector<8x8x8xf32>
    "tpu.trace_start"() <{level = 10 : i32, message = "gqk,gkd->gqd"}> : () -> ()
    %cst_24 = arith.constant dense<0.000000e+00> : vector<8x8x32xf32>
    %132 = tpu.matmul %131, %95, %cst_24 {dimension_numbers = #tpu.dot_dimension_numbers<[2], [1], [1], [2], [0, 0, 0, 1, 1, 2], [0], [0]>} : vector<8x8x8xf32>, vector<8x8x32xf32>, vector<8x8x32xf32> -> vector<8x8x32xf32>
    "tpu.trace_stop"() : () -> ()
    %133 = vector.extract_strided_slice %132 {offsets = [0, 0, 0], sizes = [1, 8, 32], strides = [1, 1, 1]} : vector<8x8x32xf32> to vector<1x8x32xf32>
    %134 = vector.shape_cast %133 : vector<1x8x32xf32> to vector<8x32xf32>
    %135 = vector.extract_strided_slice %132 {offsets = [1, 0, 0], sizes = [1, 8, 32], strides = [1, 1, 1]} : vector<8x8x32xf32> to vector<1x8x32xf32>
    %136 = vector.shape_cast %135 : vector<1x8x32xf32> to vector<8x32xf32>
    %137 = vector.extract_strided_slice %132 {offsets = [2, 0, 0], sizes = [1, 8, 32], strides = [1, 1, 1]} : vector<8x8x32xf32> to vector<1x8x32xf32>
    %138 = vector.shape_cast %137 : vector<1x8x32xf32> to vector<8x32xf32>
    %139 = vector.extract_strided_slice %132 {offsets = [3, 0, 0], sizes = [1, 8, 32], strides = [1, 1, 1]} : vector<8x8x32xf32> to vector<1x8x32xf32>
    %140 = vector.shape_cast %139 : vector<1x8x32xf32> to vector<8x32xf32>
    %141 = tpu.concatenate %134, %136, %138, %140 in 1 : vector<8x32xf32>, vector<8x32xf32>, vector<8x32xf32>, vector<8x32xf32> -> vector<8x128xf32>
    %142 = vector.extract_strided_slice %132 {offsets = [4, 0, 0], sizes = [1, 8, 32], strides = [1, 1, 1]} : vector<8x8x32xf32> to vector<1x8x32xf32>
    %143 = vector.shape_cast %142 : vector<1x8x32xf32> to vector<8x32xf32>
    %144 = vector.extract_strided_slice %132 {offsets = [5, 0, 0], sizes = [1, 8, 32], strides = [1, 1, 1]} : vector<8x8x32xf32> to vector<1x8x32xf32>
    %145 = vector.shape_cast %144 : vector<1x8x32xf32> to vector<8x32xf32>
    %146 = vector.extract_strided_slice %132 {offsets = [6, 0, 0], sizes = [1, 8, 32], strides = [1, 1, 1]} : vector<8x8x32xf32> to vector<1x8x32xf32>
    %147 = vector.shape_cast %146 : vector<1x8x32xf32> to vector<8x32xf32>
    %148 = vector.extract_strided_slice %132 {offsets = [7, 0, 0], sizes = [1, 8, 32], strides = [1, 1, 1]} : vector<8x8x32xf32> to vector<1x8x32xf32>
    %149 = vector.shape_cast %148 : vector<1x8x32xf32> to vector<8x32xf32>
    %150 = tpu.concatenate %143, %145, %147, %149 in 1 : vector<8x32xf32>, vector<8x32xf32>, vector<8x32xf32>, vector<8x32xf32> -> vector<8x128xf32>
    %151 = tpu.concatenate %141, %150 in 0 : vector<8x128xf32>, vector<8x128xf32> -> vector<16x128xf32>
    %152 = vector.extract_strided_slice %8 {offsets = [0, 384], sizes = [128, 128], strides = [1, 1]} : vector<128x512xf32> to vector<128x128xf32>
    %cst_25 = arith.constant dense<0.000000e+00> : vector<16x128xf32>
    %153 = tpu.matmul %151, %152, %cst_25 {dimension_numbers = #tpu.dot_dimension_numbers<[1], [0], [0], [1], [0, 0, 1, 1], [], []>} : vector<16x128xf32>, vector<128x128xf32>, vector<16x128xf32> -> vector<16x128xf32>
    %154 = vector.broadcast %7 : vector<1x128xf32> to vector<16x128xf32>
    %155 = arith.addf %153, %154 : vector<16x128xf32>
    %156 = vector.shape_cast %155 : vector<16x128xf32> to vector<2x8x128xf32>
    %c0_26 = arith.constant 0 : index
    %c0_27 = arith.constant 0 : index
    %c0_28 = arith.constant 0 : index
    %157 = vector.load %arg7[%c0_26, %c0_27, %c0_28] : memref<2x8x128xf32, #tpu.memory_space<vmem>>, vector<2x8x128xf32>
    tpu.vector_store %arg7[%c0_26, %c0_27, %c0_28], %156 {strides = array<i32>} : memref<2x8x128xf32, #tpu.memory_space<vmem>>, vector<2x8x128xf32>,
    return
  }
  func.func @transform_0(%arg0: i32) -> (i32, i32) {
    %c0_i32 = arith.constant 0 : i32
    %c0_i32_0 = arith.constant 0 : i32
    %c0_i32_1 = arith.constant 0 : i32
    return %c0_i32, %c0_i32_0 : i32, i32
  }
  func.func @transform_1(%arg0: i32) -> (i32, i32) {
    %c0_i32 = arith.constant 0 : i32
    %c0_i32_0 = arith.constant 0 : i32
    %c0_i32_1 = arith.constant 0 : i32
    return %c0_i32, %c0_i32_0 : i32, i32
  }
  func.func @transform_2(%arg0: i32) -> (i32, i32) {
    %c0_i32 = arith.constant 0 : i32
    %c0_i32_0 = arith.constant 0 : i32
    %c0_i32_1 = arith.constant 0 : i32
    return %c0_i32, %c0_i32_0 : i32, i32
  }
  func.func @transform_3(%arg0: i32) -> (i32, i32) {
    %c0_i32 = arith.constant 0 : i32
    %c0_i32_0 = arith.constant 0 : i32
    %c0_i32_1 = arith.constant 0 : i32
    return %c0_i32, %c0_i32_0 : i32, i32
  }
  func.func @transform_4(%arg0: i32) -> (i32, i32) {
    %c0_i32 = arith.constant 0 : i32
    %c0_i32_0 = arith.constant 0 : i32
    %c0_i32_1 = arith.constant 0 : i32
    return %c0_i32, %c0_i32_0 : i32, i32
  }
  func.func @transform_5(%arg0: i32) -> (i32, i32) {
    %c0_i32 = arith.constant 0 : i32
    %c0_i32_0 = arith.constant 0 : i32
    %c0_i32_1 = arith.constant 0 : i32
    return %c0_i32, %c0_i32_0 : i32, i32
  }
  func.func @transform_6(%arg0: i32) -> (i32, i32, i32) {
    %c0_i32 = arith.constant 0 : i32
    %c0_i32_0 = arith.constant 0 : i32
    %c0_i32_1 = arith.constant 0 : i32
    %c0_i32_2 = arith.constant 0 : i32
    return %c0_i32, %c0_i32_0, %c0_i32_1 : i32, i32, i32
  }
}

</mosaic_0001>

<llo_original>
// kernel: tpu_custom_call.1
$region0: #{tpu_custom_call.1}
  #allocation0 [shape = 'u32[]', space=smem, size = 0x4, offset = 0x4, fixed_abs, tag = 'smem constant byte address 0x4 - core index']
  #allocation1 [shape = 'u32[72,128]{1,0:T(1,128)}', space=vmem, size = 0x9000, scoped, tag = 'internal scratch']
  %s0 = inlined_call_operand.hbm [shape: f32[16,32], index: 0, kind: input, shape index: {}]
  %s1 = inlined_call_operand.hbm [shape: f32[8,128], index: 1, kind: input, shape index: {}]
  %s2 = inlined_call_operand.hbm [shape: s32[2,8], index: 2, kind: input, shape index: {}]
  %s3 = inlined_call_operand.hbm [shape: f32[32,128], index: 3, kind: input, shape index: {}]
  %s4 = inlined_call_operand.hbm [shape: f32[128,512], index: 4, kind: input, shape index: {}]
  %s5 = inlined_call_operand.hbm [shape: f32[8,128], index: 5, kind: input, shape index: {}]
  %s6 = inlined_call_operand.hbm [shape: f32[2,8,128], index: 6, kind: output, shape index: {}]
  %s7 = sld [smem:[#allocation0]]
  $region58: #{tpu_custom_call.1} parent=0
    _
  %s9 = ssub.s32 1, %s7
  %s10 = scalar_select 0, %s9, %s7
  $region1: #{tpu_custom_call.1} parent=0
    #allocation2 [shape = 'u8[8192]{0}', space=vmem, size = 0x2000, scoped, tag = 'input window, operand 0, single buffered']
    #allocation3 [shape = 's32[1]{0}', space=sflag, size = 0x4, scoped, tag = 'scoped memory for tpu_custom_call.1']
    #allocation4 [shape = 's32[1]{0}', space=sflag, size = 0x4, scoped, tag = 'scoped memory for tpu_custom_call.1']
    #allocation5 [shape = 'u8[4096]{0}', space=vmem, size = 0x1000, scoped, tag = 'input window, operand 1, single buffered']
    #allocation6 [shape = 's32[1]{0}', space=sflag, size = 0x4, scoped, tag = 'scoped memory for tpu_custom_call.1']
    #allocation7 [shape = 'u8[1024]{0}', space=vmem, size = 0x400, scoped, tag = 'input window, operand 2, single buffered']
    #allocation8 [shape = 'u8[16384]{0}', space=vmem, size = 0x4000, scoped, tag = 'input window, operand 3, single buffered']
    #allocation9 [shape = 's32[1]{0}', space=sflag, size = 0x4, scoped, tag = 'scoped memory for tpu_custom_call.1']
    #allocation10 [shape = 'u8[262144]{0}', space=vmem, size = 0x40000, scoped, tag = 'input window, operand 4, single buffered']
    #allocation11 [shape = 'u8[4096]{0}', space=vmem, size = 0x1000, scoped, tag = 'input window, operand 5, single buffered']
    #allocation12 [shape = 's32[1]{0}', space=sflag, size = 0x4, scoped, tag = 'scoped memory for tpu_custom_call.1']
    #allocation13 [shape = 'u8[8192]{0}', space=vmem, size = 0x2000, scoped, tag = 'output window, operand 0, single buffered']
    %11 = vsyncpa [#allocation3], 0
    %12 = vsyncpa [#allocation6], 0
    %13 = vsyncpa [#allocation9], 0
    %14 = vsyncpa [#allocation12], 0
    %15 = vsyncpa [#allocation4], 0
    // Predicated region
    $region2: #{tpu_custom_call.1} parent=1 // pred_check
      _
    $region3: #{tpu_custom_call.1} parent=1 // pred_check_branch
      %17 = sbr.rel (0) target = $region5
    $region4: #{tpu_custom_call.1} parent=1 // pred_region
      %19 = vsyncadd [#allocation3], 0
      %s20 = sshll.u32 %s0, 4
      %s21 = int_to_ptr.hbm [resolvable:$true] %s20
      %s22 = sshll.u32 [#allocation2], 4
      %s23 = int_to_ptr.vmem [resolvable:$true] %s22
      %28 = dma.hbm_to_vmem [thread:$0]  %s21, 256, %s23, [#allocation3], 128, 128, 8
    $region5: #{tpu_custom_call.1} parent=1 // pred_fallthru
      _
    // Predicated region
    $region6: #{tpu_custom_call.1} parent=1 // pred_check
      _
    $region7: #{tpu_custom_call.1} parent=1 // pred_check_branch
      %30 = sbr.rel (0) target = $region9
    $region8: #{tpu_custom_call.1} parent=1 // pred_region
      %32 = vsyncadd [#allocation6], 0
      %s34 = sshll.u32 %s1, 4
      %s35 = int_to_ptr.hbm [resolvable:$true] %s34
      %s36 = sshll.u32 [#allocation5], 4
      %s37 = int_to_ptr.vmem [resolvable:$true] %s36
      %39 = dma.hbm_to_vmem [thread:$0]  %s35, 128, %s37, [#allocation6]
    $region9: #{tpu_custom_call.1} parent=1 // pred_fallthru
      _
    // Predicated region
    $region10: #{tpu_custom_call.1} parent=1 // pred_check
      _
    $region11: #{tpu_custom_call.1} parent=1 // pred_check_branch
      %41 = sbr.rel (0) target = $region13
    $region12: #{tpu_custom_call.1} parent=1 // pred_region
      %43 = vsyncadd [#allocation6], 0
      %s45 = sshll.u32 %s2, 4
      %s46 = int_to_ptr.hbm [resolvable:$true] %s45
      %s47 = sshll.u32 [#allocation7], 4
      %s48 = int_to_ptr.vmem [resolvable:$true] %s47
      %50 = dma.hbm_to_vmem [thread:$0]  %s46, 32, %s48, [#allocation6]
    $region13: #{tpu_custom_call.1} parent=1 // pred_fallthru
      _
    // Predicated region
    $region14: #{tpu_custom_call.1} parent=1 // pred_check
      _
    $region15: #{tpu_custom_call.1} parent=1 // pred_check_branch
      %52 = sbr.rel (0) target = $region17
    $region16: #{tpu_custom_call.1} parent=1 // pred_region
      %54 = vsyncadd [#allocation9], 0
      %s55 = sshll.u32 %s3, 4
      %s56 = int_to_ptr.hbm [resolvable:$true] %s55
      %s57 = sshll.u32 [#allocation8], 4
      %s58 = int_to_ptr.vmem [resolvable:$true] %s57
      %63 = dma.hbm_to_vmem [thread:$0]  %s56, 512, %s58, [#allocation9], 128, 128, 8
    $region17: #{tpu_custom_call.1} parent=1 // pred_fallthru
      _
    // Predicated region
    $region18: #{tpu_custom_call.1} parent=1 // pred_check
      _
    $region19: #{tpu_custom_call.1} parent=1 // pred_check_branch
      %65 = sbr.rel (0) target = $region21
    $region20: #{tpu_custom_call.1} parent=1 // pred_region
      %67 = vsyncadd [#allocation9], 0
      %s68 = sshll.u32 %s4, 4
      %s69 = int_to_ptr.hbm [resolvable:$true] %s68
      %s70 = sshll.u32 [#allocation10], 4
      %s71 = int_to_ptr.vmem [resolvable:$true] %s70
      %76 = dma.hbm_to_vmem [thread:$0]  %s69, 8192, %s71, [#allocation9], 512, 512, 32
    $region21: #{tpu_custom_call.1} parent=1 // pred_fallthru
      _
    // Predicated region
    $region22: #{tpu_custom_call.1} parent=1 // pred_check
      _
    $region23: #{tpu_custom_call.1} parent=1 // pred_check_branch
      %78 = sbr.rel (0) target = $region25
    $region24: #{tpu_custom_call.1} parent=1 // pred_region
      %80 = vsyncadd [#allocation12], 0
      %s82 = sshll.u32 %s5, 4
      %s83 = int_to_ptr.hbm [resolvable:$true] %s82
      %s84 = sshll.u32 [#allocation11], 4
      %s85 = int_to_ptr.vmem [resolvable:$true] %s84
      %87 = dma.hbm_to_vmem [thread:$0]  %s83, 128, %s85, [#allocation12]
    $region25: #{tpu_custom_call.1} parent=1 // pred_fallthru
      _
    // Predicated region
    $region26: #{tpu_custom_call.1} parent=1 // pred_check
      _
    $region27: #{tpu_custom_call.1} parent=1 // pred_check_branch
      %89 = sbr.rel (0) target = $region29
    $region28: #{tpu_custom_call.1} parent=1 // pred_region
      %91 = dma.done [#allocation3], 256
    $region29: #{tpu_custom_call.1} parent=1 // pred_fallthru
      _
    // Predicated region
    $region30: #{tpu_custom_call.1} parent=1 // pred_check
      _
    $region31: #{tpu_custom_call.1} parent=1 // pred_check_branch
      %93 = sbr.rel (0) target = $region33
    $region32: #{tpu_custom_call.1} parent=1 // pred_region
      %95 = dma.done [#allocation6], 128
    $region33: #{tpu_custom_call.1} parent=1 // pred_fallthru
      _
    // Predicated region
    $region34: #{tpu_custom_call.1} parent=1 // pred_check
      _
    $region35: #{tpu_custom_call.1} parent=1 // pred_check_branch
      %97 = sbr.rel (0) target = $region37
    $region36: #{tpu_custom_call.1} parent=1 // pred_region
      %99 = dma.done [#allocation6], 32
    $region37: #{tpu_custom_call.1} parent=1 // pred_fallthru
      _
    // Predicated region
    $region38: #{tpu_custom_call.1} parent=1 // pred_check
      _
    $region39: #{tpu_custom_call.1} parent=1 // pred_check_branch
      %101 = sbr.rel (0) target = $region41
    $region40: #{tpu_custom_call.1} parent=1 // pred_region
      %103 = dma.done [#allocation9], 512
    $region41: #{tpu_custom_call.1} parent=1 // pred_fallthru
      _
    // Predicated region
    $region42: #{tpu_custom_call.1} parent=1 // pred_check
      _
    $region43: #{tpu_custom_call.1} parent=1 // pred_check_branch
      %105 = sbr.rel (0) target = $region45
    $region44: #{tpu_custom_call.1} parent=1 // pred_region
      %107 = dma.done [#allocation9], 8192
    $region45: #{tpu_custom_call.1} parent=1 // pred_fallthru
      _
    // Predicated region
    $region46: #{tpu_custom_call.1} parent=1 // pred_check
      _
    $region47: #{tpu_custom_call.1} parent=1 // pred_check_branch
      %109 = sbr.rel (0) target = $region49
    $region48: #{tpu_custom_call.1} parent=1 // pred_region
      %111 = dma.done [#allocation12], 128
    $region49: #{tpu_custom_call.1} parent=1 // pred_fallthru
      _
    %v112 = vld [vmem:[#allocation11] sm:$0xff]
    %v113 = vld [vmem:[#allocation10] sm:$0xff]
    %v114 = vld [vmem:[#allocation10 + $0x8] sm:$0xff]
    %v115 = vld [vmem:[#allocation10 + $0x10] sm:$0xff]
    %v116 = vld [vmem:[#allocation10 + $0x18] sm:$0xff]
    %v117 = vld [vmem:[#allocation10 + $0x20] sm:$0xff]
    %v118 = vld [vmem:[#allocation10 + $0x28] sm:$0xff]
    %v119 = vld [vmem:[#allocation10 + $0x30] sm:$0xff]
    %v120 = vld [vmem:[#allocation10 + $0x38] sm:$0xff]
    %v121 = vld [vmem:[#allocation10 + $0x40] sm:$0xff]
    %v122 = vld [vmem:[#allocation10 + $0x48] sm:$0xff]
    %v123 = vld [vmem:[#allocation10 + $0x50] sm:$0xff]
    %v124 = vld [vmem:[#allocation10 + $0x58] sm:$0xff]
    %v125 = vld [vmem:[#allocation10 + $0x60] sm:$0xff]
    %v126 = vld [vmem:[#allocation10 + $0x68] sm:$0xff]
    %v127 = vld [vmem:[#allocation10 + $0x70] sm:$0xff]
    %v128 = vld [vmem:[#allocation10 + $0x78] sm:$0xff]
    %v129 = vld [vmem:[#allocation10 + $0x80] sm:$0xff]
    %v130 = vld [vmem:[#allocation10 + $0x88] sm:$0xff]
    %v131 = vld [vmem:[#allocation10 + $0x90] sm:$0xff]
    %v132 = vld [vmem:[#allocation10 + $0x98] sm:$0xff]
    %v133 = vld [vmem:[#allocation10 + $0xa0] sm:$0xff]
    %v134 = vld [vmem:[#allocation10 + $0xa8] sm:$0xff]
    %v135 = vld [vmem:[#allocation10 + $0xb0] sm:$0xff]
    %v136 = vld [vmem:[#allocation10 + $0xb8] sm:$0xff]
    %v137 = vld [vmem:[#allocation10 + $0xc0] sm:$0xff]
    %v138 = vld [vmem:[#allocation10 + $0xc8] sm:$0xff]
    %v139 = vld [vmem:[#allocation10 + $0xd0] sm:$0xff]
    %v140 = vld [vmem:[#allocation10 + $0xd8] sm:$0xff]
    %v141 = vld [vmem:[#allocation10 + $0xe0] sm:$0xff]
    %v142 = vld [vmem:[#allocation10 + $0xe8] sm:$0xff]
    %v143 = vld [vmem:[#allocation10 + $0xf0] sm:$0xff]
    %v144 = vld [vmem:[#allocation10 + $0xf8] sm:$0xff]
    %v145 = vld [vmem:[#allocation10 + $0x100] sm:$0xff]
    %v146 = vld [vmem:[#allocation10 + $0x108] sm:$0xff]
    %v147 = vld [vmem:[#allocation10 + $0x110] sm:$0xff]
    %v148 = vld [vmem:[#allocation10 + $0x118] sm:$0xff]
    %v149 = vld [vmem:[#allocation10 + $0x120] sm:$0xff]
    %v150 = vld [vmem:[#allocation10 + $0x128] sm:$0xff]
    %v151 = vld [vmem:[#allocation10 + $0x130] sm:$0xff]
    %v152 = vld [vmem:[#allocation10 + $0x138] sm:$0xff]
    %v153 = vld [vmem:[#allocation10 + $0x140] sm:$0xff]
    %v154 = vld [vmem:[#allocation10 + $0x148] sm:$0xff]
    %v155 = vld [vmem:[#allocation10 + $0x150] sm:$0xff]
    %v156 = vld [vmem:[#allocation10 + $0x158] sm:$0xff]
    %v157 = vld [vmem:[#allocation10 + $0x160] sm:$0xff]
    %v158 = vld [vmem:[#allocation10 + $0x168] sm:$0xff]
    %v159 = vld [vmem:[#allocation10 + $0x170] sm:$0xff]
    %v160 = vld [vmem:[#allocation10 + $0x178] sm:$0xff]
    %v161 = vld [vmem:[#allocation10 + $0x180] sm:$0xff]
    %v162 = vld [vmem:[#allocation10 + $0x188] sm:$0xff]
    %v163 = vld [vmem:[#allocation10 + $0x190] sm:$0xff]
    %v164 = vld [vmem:[#allocation10 + $0x198] sm:$0xff]
    %v165 = vld [vmem:[#allocation10 + $0x1a0] sm:$0xff]
    %v166 = vld [vmem:[#allocation10 + $0x1a8] sm:$0xff]
    %v167 = vld [vmem:[#allocation10 + $0x1b0] sm:$0xff]
    %v168 = vld [vmem:[#allocation10 + $0x1b8] sm:$0xff]
    %v169 = vld [vmem:[#allocation10 + $0x1c0] sm:$0xff]
    %v170 = vld [vmem:[#allocation10 + $0x1c8] sm:$0xff]
    %v171 = vld [vmem:[#allocation10 + $0x1d0] sm:$0xff]
    %v172 = vld [vmem:[#allocation10 + $0x1d8] sm:$0xff]
    %v173 = vld [vmem:[#allocation10 + $0x1e0] sm:$0xff]
    %v174 = vld [vmem:[#allocation10 + $0x1e8] sm:$0xff]
    %v175 = vld [vmem:[#allocation10 + $0x1f0] sm:$0xff]
    %v176 = vld [vmem:[#allocation10 + $0x1f8] sm:$0xff]
    %v177 = vld [vmem:[#allocation2] sm:$0xff]
    %v178 = vld [vmem:[#allocation2 + $0x8] sm:$0xff]
    %v179 = vld [vmem:[#allocation8] sm:$0xff]
    %v180 = vld [vmem:[#allocation8 + $0x8] sm:$0xff]
    %v181 = vld [vmem:[#allocation8 + $0x10] sm:$0xff]
    %v182 = vld [vmem:[#allocation8 + $0x18] sm:$0xff]
    %v183 = vperm.slane %v112, 0
    %vm184 = vcmask 261120
    %v186 = vsel %vm184, %v177, 0
    %v189 = vsel %vm184, %v178, 0
    %191 = vmatpush.msra.mxu0 0.0
    %192 = vmatpush.msra.mxu0 0.0
    %193 = vmatpush.msra.mxu0 0.0
    %194 = vmatpush.msra.mxu0 0.0
    %195 = vmatpush.msra.mxu0 0.0
    %196 = vmatpush.msra.mxu0 0.0
    %197 = vmatpush.msra.mxu0 0.0
    %198 = vmatpush.msra.mxu0 0.0
    %199 = vmatpush.msra.mxu0 0.0
    %200 = vmatpush.msra.mxu0 0.0
    %201 = vmatpush.msra.mxu0 0.0
    %202 = vmatpush.msra.mxu0 0.0
    %203 = vmatpush.msra.mxu0 %v182
    %204 = vmatpush.msra.mxu0 %v181
    %205 = vmatpush.msra.mxu0 %v180
    %206 = vmatpush.msra.mxu0 %v179
    %207 = vmatmul.f32.gmra.mxu0 %v186
    %v208 = vpop.f32.mrf.mxu0
    %v209 = vadd.f32 %v183, %v208
    %210 = vmatmul.f32.gmra.mxu0 %v189
    %v211 = vpop.f32.mrf.mxu0
    %v212 = vadd.f32 %v183, %v211
    %213 = vdwg.mxu0
    %214 = vadd.xlane.f32.xlu0 %v209
    %v215 = vpop.xlane.xlu0 %214
    %216 = vadd.xlane.f32.xlu0 %v212
    %v217 = vpop.xlane.xlu0 %216
    %v218 = vrcp.pop 128.0
    %v219 = vmul.f32 128.0, %v218
    %v220 = vsub.f32 1.0, %v219
    %v221 = vmul.f32 %v218, %v220
    %v222 = vadd.f32 %v218, %v221
    %vm223 = vweird.f32 %v218
    %v224 = vsel %vm223, %v218, %v222
    %v225 = vmul.f32 %v215, %v224
    %v226 = vmul.f32 %v217, %v224
    %v227 = vsub.f32 %v209, %v225
    %v228 = vsub.f32 %v212, %v226
    %v229 = vmul.f32 %v227, %v227
    %v230 = vmul.f32 %v228, %v228
    %231 = vadd.xlane.f32.xlu0 %v229
    %v232 = vpop.xlane.xlu0 %231
    %233 = vadd.xlane.f32.xlu0 %v230
    %v234 = vpop.xlane.xlu0 %233
    %v235 = vmul.f32 %v232, %v224
    %v236 = vmul.f32 %v234, %v224
    %v237 = vadd.f32 %v235, 1e-05
    %v238 = vadd.f32 %v236, 1e-05
    %v239 = vrsqrt.pop %v237
    %v240 = vmul.f32 %v239, %v237
    %v241 = vmul.f32 %v240, %v239
    %v242 = vmul.f32 0.5, %v241
    %v243 = vsub.f32 1.5, %v242
    %v244 = vmul.f32 %v239, %v243
    %vm245 = vweird.f32 %v237
    %vm246 = vweird.f32 %v239
    %vm247 = vmor %vm245, %vm246
    %v248 = vsel %vm247, %v239, %v244
    %v249 = vrsqrt.pop %v238
    %v250 = vmul.f32 %v249, %v238
    %v251 = vmul.f32 %v250, %v249
    %v252 = vmul.f32 0.5, %v251
    %v253 = vsub.f32 1.5, %v252
    %v254 = vmul.f32 %v249, %v253
    %vm255 = vweird.f32 %v238
    %vm256 = vweird.f32 %v249
    %vm257 = vmor %vm255, %vm256
    %v258 = vsel %vm257, %v249, %v254
    %v259 = vperm.slane %v112, 1
    %v260 = vmul.f32 %v248, %v259
    %v261 = vmul.f32 %v258, %v259
    %v262 = vmul.f32 %v227, %v260
    %v263 = vmul.f32 %v228, %v261
    %v264 = vperm.slane %v112, 2
    %v265 = vadd.f32 %v262, %v264
    %v266 = vadd.f32 %v263, %v264
    %v267 = vld [vmem:[#allocation5] sm:$0xff]
    %v268 = vperm.slane %v112, 3
    %269 = vmatpush.msra.mxu0 %v173
    %270 = vmatpush.msra.mxu0 %v169
    %271 = vmatpush.msra.mxu0 %v165
    %272 = vmatpush.msra.mxu0 %v161
    %273 = vmatpush.msra.mxu0 %v157
    %274 = vmatpush.msra.mxu0 %v153
    %275 = vmatpush.msra.mxu0 %v149
    %276 = vmatpush.msra.mxu0 %v145
    %277 = vmatpush.msra.mxu0 %v141
    %278 = vmatpush.msra.mxu0 %v137
    %279 = vmatpush.msra.mxu0 %v133
    %280 = vmatpush.msra.mxu0 %v129
    %281 = vmatpush.msra.mxu0 %v125
    %282 = vmatpush.msra.mxu0 %v121
    %283 = vmatpush.msra.mxu0 %v117
    %284 = vmatpush.msra.mxu0 %v113
    %285 = vmatmul.f32.gmra.mxu0 %v267
    %v286 = vpop.f32.mrf.mxu0
    %v287 = vadd.f32 %v268, %v286
    %288 = vdwg.mxu0
    %v289 = vmul.f32 %v287, 0.17677669
    %290 = vmatpush.msra.mxu0 %v174
    %291 = vmatpush.msra.mxu0 %v170
    %292 = vmatpush.msra.mxu0 %v166
    %293 = vmatpush.msra.mxu0 %v162
    %294 = vmatpush.msra.mxu0 %v158
    %295 = vmatpush.msra.mxu0 %v154
    %296 = vmatpush.msra.mxu0 %v150
    %297 = vmatpush.msra.mxu0 %v146
    %298 = vmatpush.msra.mxu0 %v142
    %299 = vmatpush.msra.mxu0 %v138
    %300 = vmatpush.msra.mxu0 %v134
    %301 = vmatpush.msra.mxu0 %v130
    %302 = vmatpush.msra.mxu0 %v126
    %303 = vmatpush.msra.mxu0 %v122
    %304 = vmatpush.msra.mxu0 %v118
    %305 = vmatpush.msra.mxu0 %v114
    %306 = vmatmul.f32.gmra.mxu0 %v265
    %v307 = vpop.f32.mrf.mxu0
    %v308 = vadd.f32 0.0, %v307
    %309 = vmatmul.f32.gmra.mxu0 %v266
    %v310 = vpop.f32.mrf.mxu0
    %v311 = vadd.f32 0.0, %v310
    %312 = vdwg.mxu0
    %313 = vmatpush.msra.mxu0 %v175
    %314 = vmatpush.msra.mxu0 %v171
    %315 = vmatpush.msra.mxu0 %v167
    %316 = vmatpush.msra.mxu0 %v163
    %317 = vmatpush.msra.mxu0 %v159
    %318 = vmatpush.msra.mxu0 %v155
    %319 = vmatpush.msra.mxu0 %v151
    %320 = vmatpush.msra.mxu0 %v147
    %321 = vmatpush.msra.mxu0 %v143
    %322 = vmatpush.msra.mxu0 %v139
    %323 = vmatpush.msra.mxu0 %v135
    %324 = vmatpush.msra.mxu0 %v131
    %325 = vmatpush.msra.mxu0 %v127
    %326 = vmatpush.msra.mxu0 %v123
    %327 = vmatpush.msra.mxu0 %v119
    %328 = vmatpush.msra.mxu0 %v115
    %329 = vmatmul.f32.gmra.mxu0 %v265
    %v330 = vpop.f32.mrf.mxu0
    %v331 = vadd.f32 0.0, %v330
    %332 = vmatmul.f32.gmra.mxu0 %v266
    %v333 = vpop.f32.mrf.mxu0
    %v334 = vadd.f32 0.0, %v333
    %335 = vdwg.mxu0
    %v336 = vperm.slane %v112, 4
    %v337 = vadd.f32 %v308, %v336
    %v338 = vadd.f32 %v311, %v336
    %v339 = vperm.slane %v112, 5
    %v340 = vadd.f32 %v331, %v339
    %v341 = vadd.f32 %v334, %v339
    %343 = vrot.lane.b32.xlu0 %v289, 96
    %v344 = vpop.permute.xlu0 %343
    %345 = vrot.lane.b32.xlu0 %v289, 64
    %v346 = vpop.permute.xlu0 %345
    %347 = vrot.lane.b32.xlu0 %v289, 32
    %v348 = vpop.permute.xlu0 %347
    %350 = vrot.lane.b32.xlu0 %v337, 96
    %v351 = vpop.permute.xlu0 %350
    %352 = vrot.lane.b32.xlu0 %v337, 64
    %v353 = vpop.permute.xlu0 %352
    %354 = vrot.lane.b32.xlu0 %v337, 32
    %v355 = vpop.permute.xlu0 %354
    %357 = vrot.lane.b32.xlu0 %v338, 96
    %v358 = vpop.permute.xlu0 %357
    %359 = vrot.lane.b32.xlu0 %v338, 64
    %v360 = vpop.permute.xlu0 %359
    %361 = vrot.lane.b32.xlu0 %v338, 32
    %v362 = vpop.permute.xlu0 %361
    %364 = vrot.lane.b32.xlu0 %v340, 96
    %v365 = vpop.permute.xlu0 %364
    %367 = vrot.lane.b32.xlu0 %v340, 64
    %v368 = vpop.permute.xlu0 %367
    %370 = vrot.lane.b32.xlu0 %v340, 32
    %v371 = vpop.permute.xlu0 %370
    %374 = vrot.lane.b32.xlu0 %v341, 96
    %v375 = vpop.permute.xlu0 %374
    %377 = vrot.lane.b32.xlu0 %v341, 64
    %v378 = vpop.permute.xlu0 %377
    %380 = vrot.lane.b32.xlu0 %v341, 32
    %v381 = vpop.permute.xlu0 %380
    %v383 = vld [vmem:[#allocation7] sm:$0x3]
    %vm384 = vcmp.ne.s32.totalorder %v383, 0
    %v385 = vsel %vm384, -1e+30, 0.0
    %v387 = vrot.slane %v385, 1
    %v389 = vperm.slane %v385, 0
    %v390 = vperm.slane %v387, 0
    %v391 = vsel %vm184, %v289, 0
    %v393 = vsel %vm184, %v337, 0
    %395 = vmatpush.xpose.msra.mxu0 0.0
    %396 = vmatpush.xpose.msra.mxu0 0.0
    %397 = vmatpush.xpose.msra.mxu0 0.0
    %398 = vmatpush.xpose.msra.mxu0 0.0
    %399 = vmatpush.xpose.msra.mxu0 0.0
    %400 = vmatpush.xpose.msra.mxu0 0.0
    %401 = vmatpush.xpose.msra.mxu0 0.0
    %402 = vmatpush.xpose.msra.mxu0 0.0
    %403 = vmatpush.xpose.msra.mxu0 0.0
    %404 = vmatpush.xpose.msra.mxu0 0.0
    %405 = vmatpush.xpose.msra.mxu0 0.0
    %406 = vmatpush.xpose.msra.mxu0 0.0
    %407 = vmatpush.xpose.msra.mxu0 0.0
    %408 = vmatpush.xpose.msra.mxu0 0.0
    %409 = vmatpush.xpose.msra.mxu0 0.0
    %410 = vmatpush.xpose.msra.mxu0 %v393
    %411 = vmatmul.f32.gmra.mxu0 %v391
    %v412 = vpop.f32.mrf.mxu0
    %v413 = vadd.f32 %v389, %v412
    %414 = vdwg.mxu0
    %v415 = vsel %vm184, %v344, 0
    %v417 = vsel %vm184, %v351, 0
    %419 = vmatpush.xpose.msra.mxu0 0.0
    %420 = vmatpush.xpose.msra.mxu0 0.0
    %421 = vmatpush.xpose.msra.mxu0 0.0
    %422 = vmatpush.xpose.msra.mxu0 0.0
    %423 = vmatpush.xpose.msra.mxu0 0.0
    %424 = vmatpush.xpose.msra.mxu0 0.0
    %425 = vmatpush.xpose.msra.mxu0 0.0
    %426 = vmatpush.xpose.msra.mxu0 0.0
    %427 = vmatpush.xpose.msra.mxu0 0.0
    %428 = vmatpush.xpose.msra.mxu0 0.0
    %429 = vmatpush.xpose.msra.mxu0 0.0
    %430 = vmatpush.xpose.msra.mxu0 0.0
    %431 = vmatpush.xpose.msra.mxu0 0.0
    %432 = vmatpush.xpose.msra.mxu0 0.0
    %433 = vmatpush.xpose.msra.mxu0 0.0
    %434 = vmatpush.xpose.msra.mxu0 %v417
    %435 = vmatmul.f32.gmra.mxu0 %v415
    %v436 = vpop.f32.mrf.mxu0
    %v437 = vadd.f32 %v389, %v436
    %438 = vdwg.mxu0
    %v439 = vsel %vm184, %v346, 0
    %v441 = vsel %vm184, %v353, 0
    %443 = vmatpush.xpose.msra.mxu0 0.0
    %444 = vmatpush.xpose.msra.mxu0 0.0
    %445 = vmatpush.xpose.msra.mxu0 0.0
    %446 = vmatpush.xpose.msra.mxu0 0.0
    %447 = vmatpush.xpose.msra.mxu0 0.0
    %448 = vmatpush.xpose.msra.mxu0 0.0
    %449 = vmatpush.xpose.msra.mxu0 0.0
    %450 = vmatpush.xpose.msra.mxu0 0.0
    %451 = vmatpush.xpose.msra.mxu0 0.0
    %452 = vmatpush.xpose.msra.mxu0 0.0
    %453 = vmatpush.xpose.msra.mxu0 0.0
    %454 = vmatpush.xpose.msra.mxu0 0.0
    %455 = vmatpush.xpose.msra.mxu0 0.0
    %456 = vmatpush.xpose.msra.mxu0 0.0
    %457 = vmatpush.xpose.msra.mxu0 0.0
    %458 = vmatpush.xpose.msra.mxu0 %v441
    %459 = vmatmul.f32.gmra.mxu0 %v439
    %v460 = vpop.f32.mrf.mxu0
    %v461 = vadd.f32 %v389, %v460
    %462 = vdwg.mxu0
    %v463 = vsel %vm184, %v348, 0
    %v465 = vsel %vm184, %v355, 0
    %467 = vmatpush.xpose.msra.mxu0 0.0
    %468 = vmatpush.xpose.msra.mxu0 0.0
    %469 = vmatpush.xpose.msra.mxu0 0.0
    %470 = vmatpush.xpose.msra.mxu0 0.0
    %471 = vmatpush.xpose.msra.mxu0 0.0
    %472 = vmatpush.xpose.msra.mxu0 0.0
    %473 = vmatpush.xpose.msra.mxu0 0.0
    %474 = vmatpush.xpose.msra.mxu0 0.0
    %475 = vmatpush.xpose.msra.mxu0 0.0
    %476 = vmatpush.xpose.msra.mxu0 0.0
    %477 = vmatpush.xpose.msra.mxu0 0.0
    %478 = vmatpush.xpose.msra.mxu0 0.0
    %479 = vmatpush.xpose.msra.mxu0 0.0
    %480 = vmatpush.xpose.msra.mxu0 0.0
    %481 = vmatpush.xpose.msra.mxu0 0.0
    %482 = vmatpush.xpose.msra.mxu0 %v465
    %483 = vmatmul.f32.gmra.mxu0 %v463
    %v484 = vpop.f32.mrf.mxu0
    %v485 = vadd.f32 %v389, %v484
    %486 = vdwg.mxu0
    %v487 = vsel %vm184, %v338, 0
    %489 = vmatpush.xpose.msra.mxu0 0.0
    %490 = vmatpush.xpose.msra.mxu0 0.0
    %491 = vmatpush.xpose.msra.mxu0 0.0
    %492 = vmatpush.xpose.msra.mxu0 0.0
    %493 = vmatpush.xpose.msra.mxu0 0.0
    %494 = vmatpush.xpose.msra.mxu0 0.0
    %495 = vmatpush.xpose.msra.mxu0 0.0
    %496 = vmatpush.xpose.msra.mxu0 0.0
    %497 = vmatpush.xpose.msra.mxu0 0.0
    %498 = vmatpush.xpose.msra.mxu0 0.0
    %499 = vmatpush.xpose.msra.mxu0 0.0
    %500 = vmatpush.xpose.msra.mxu0 0.0
    %501 = vmatpush.xpose.msra.mxu0 0.0
    %502 = vmatpush.xpose.msra.mxu0 0.0
    %503 = vmatpush.xpose.msra.mxu0 0.0
    %504 = vmatpush.xpose.msra.mxu0 %v487
    %505 = vmatmul.f32.gmra.mxu0 %v391
    %v506 = vpop.f32.mrf.mxu0
    %v507 = vadd.f32 %v390, %v506
    %508 = vdwg.mxu0
    %v509 = vsel %vm184, %v358, 0
    %511 = vmatpush.xpose.msra.mxu0 0.0
    %512 = vmatpush.xpose.msra.mxu0 0.0
    %513 = vmatpush.xpose.msra.mxu0 0.0
    %514 = vmatpush.xpose.msra.mxu0 0.0
    %515 = vmatpush.xpose.msra.mxu0 0.0
    %516 = vmatpush.xpose.msra.mxu0 0.0
    %517 = vmatpush.xpose.msra.mxu0 0.0
    %518 = vmatpush.xpose.msra.mxu0 0.0
    %519 = vmatpush.xpose.msra.mxu0 0.0
    %520 = vmatpush.xpose.msra.mxu0 0.0
    %521 = vmatpush.xpose.msra.mxu0 0.0
    %522 = vmatpush.xpose.msra.mxu0 0.0
    %523 = vmatpush.xpose.msra.mxu0 0.0
    %524 = vmatpush.xpose.msra.mxu0 0.0
    %525 = vmatpush.xpose.msra.mxu0 0.0
    %526 = vmatpush.xpose.msra.mxu0 %v509
    %527 = vmatmul.f32.gmra.mxu0 %v415
    %v528 = vpop.f32.mrf.mxu0
    %v529 = vadd.f32 %v390, %v528
    %530 = vdwg.mxu0
    %v531 = vsel %vm184, %v360, 0
    %533 = vmatpush.xpose.msra.mxu0 0.0
    %534 = vmatpush.xpose.msra.mxu0 0.0
    %535 = vmatpush.xpose.msra.mxu0 0.0
    %536 = vmatpush.xpose.msra.mxu0 0.0
    %537 = vmatpush.xpose.msra.mxu0 0.0
    %538 = vmatpush.xpose.msra.mxu0 0.0
    %539 = vmatpush.xpose.msra.mxu0 0.0
    %540 = vmatpush.xpose.msra.mxu0 0.0
    %541 = vmatpush.xpose.msra.mxu0 0.0
    %542 = vmatpush.xpose.msra.mxu0 0.0
    %543 = vmatpush.xpose.msra.mxu0 0.0
    %544 = vmatpush.xpose.msra.mxu0 0.0
    %545 = vmatpush.xpose.msra.mxu0 0.0
    %546 = vmatpush.xpose.msra.mxu0 0.0
    %547 = vmatpush.xpose.msra.mxu0 0.0
    %548 = vmatpush.xpose.msra.mxu0 %v531
    %549 = vmatmul.f32.gmra.mxu0 %v439
    %v550 = vpop.f32.mrf.mxu0
    %v551 = vadd.f32 %v390, %v550
    %552 = vdwg.mxu0
    %v553 = vsel %vm184, %v362, 0
    %555 = vmatpush.xpose.msra.mxu0 0.0
    %556 = vmatpush.xpose.msra.mxu0 0.0
    %557 = vmatpush.xpose.msra.mxu0 0.0
    %558 = vmatpush.xpose.msra.mxu0 0.0
    %559 = vmatpush.xpose.msra.mxu0 0.0
    %560 = vmatpush.xpose.msra.mxu0 0.0
    %561 = vmatpush.xpose.msra.mxu0 0.0
    %562 = vmatpush.xpose.msra.mxu0 0.0
    %563 = vmatpush.xpose.msra.mxu0 0.0
    %564 = vmatpush.xpose.msra.mxu0 0.0
    %565 = vmatpush.xpose.msra.mxu0 0.0
    %566 = vmatpush.xpose.msra.mxu0 0.0
    %567 = vmatpush.xpose.msra.mxu0 0.0
    %568 = vmatpush.xpose.msra.mxu0 0.0
    %569 = vmatpush.xpose.msra.mxu0 0.0
    %570 = vmatpush.xpose.msra.mxu0 %v553
    %571 = vmatmul.f32.gmra.mxu0 %v463
    %v572 = vpop.f32.mrf.mxu0
    %v573 = vadd.f32 %v390, %v572
    %574 = vdwg.mxu0
    %vm575 = vcmask 64512
    %v576 = vsel %vm575, %v413, -inf
    %577 = vmax.xlane.f32.xlu0 %v576
    %v578 = vpop.xlane.xlu0 %577
    %v579 = vsel %vm575, %v437, -inf
    %580 = vmax.xlane.f32.xlu0 %v579
    %v581 = vpop.xlane.xlu0 %580
    %v582 = vsel %vm575, %v461, -inf
    %583 = vmax.xlane.f32.xlu0 %v582
    %v584 = vpop.xlane.xlu0 %583
    %v585 = vsel %vm575, %v485, -inf
    %586 = vmax.xlane.f32.xlu0 %v585
    %v587 = vpop.xlane.xlu0 %586
    %v588 = vsel %vm575, %v507, -inf
    %589 = vmax.xlane.f32.xlu0 %v588
    %v590 = vpop.xlane.xlu0 %589
    %v591 = vsel %vm575, %v529, -inf
    %592 = vmax.xlane.f32.xlu0 %v591
    %v593 = vpop.xlane.xlu0 %592
    %v594 = vsel %vm575, %v551, -inf
    %595 = vmax.xlane.f32.xlu0 %v594
    %v596 = vpop.xlane.xlu0 %595
    %v597 = vsel %vm575, %v573, -inf
    %598 = vmax.xlane.f32.xlu0 %v597
    %v599 = vpop.xlane.xlu0 %598
    %v600 = vsub.f32 %v413, %v578
    %v601 = vsub.f32 %v437, %v581
    %v602 = vsub.f32 %v461, %v584
    %v603 = vsub.f32 %v485, %v587
    %v604 = vsub.f32 %v507, %v590
    %v605 = vsub.f32 %v529, %v593
    %v606 = vsub.f32 %v551, %v596
    %v607 = vsub.f32 %v573, %v599
    %v608 = vmul.f32 %v600, 1.442695
    %v609 = vpow.pop %v608
    %v610 = vmul.f32 %v601, 1.442695
    %v611 = vpow.pop %v610
    %v612 = vmul.f32 %v602, 1.442695
    %v613 = vpow.pop %v612
    %v614 = vmul.f32 %v603, 1.442695
    %v615 = vpow.pop %v614
    %v616 = vmul.f32 %v604, 1.442695
    %v617 = vpow.pop %v616
    %v618 = vmul.f32 %v605, 1.442695
    %v619 = vpow.pop %v618
    %v620 = vmul.f32 %v606, 1.442695
    %v621 = vpow.pop %v620
    %v622 = vmul.f32 %v607, 1.442695
    %v623 = vpow.pop %v622
    %v624 = vsel %vm575, %v609, 0.0
    %625 = vadd.xlane.f32.xlu0 %v624
    %v626 = vpop.xlane.xlu0 %625
    %v627 = vsel %vm575, %v611, 0.0
    %628 = vadd.xlane.f32.xlu0 %v627
    %v629 = vpop.xlane.xlu0 %628
    %v630 = vsel %vm575, %v613, 0.0
    %631 = vadd.xlane.f32.xlu0 %v630
    %v632 = vpop.xlane.xlu0 %631
    %v633 = vsel %vm575, %v615, 0.0
    %634 = vadd.xlane.f32.xlu0 %v633
    %v635 = vpop.xlane.xlu0 %634
    %v636 = vsel %vm575, %v617, 0.0
    %637 = vadd.xlane.f32.xlu0 %v636
    %v638 = vpop.xlane.xlu0 %637
    %v639 = vsel %vm575, %v619, 0.0
    %640 = vadd.xlane.f32.xlu0 %v639
    %v641 = vpop.xlane.xlu0 %640
    %v642 = vsel %vm575, %v621, 0.0
    %643 = vadd.xlane.f32.xlu0 %v642
    %v644 = vpop.xlane.xlu0 %643
    %v645 = vsel %vm575, %v623, 0.0
    %646 = vadd.xlane.f32.xlu0 %v645
    %v647 = vpop.xlane.xlu0 %646
    %v648 = vrcp.pop %v626
    %v649 = vrcp.pop %v629
    %v650 = vrcp.pop %v632
    %v651 = vrcp.pop %v635
    %v652 = vrcp.pop %v638
    %v653 = vrcp.pop %v641
    %v654 = vrcp.pop %v644
    %v655 = vrcp.pop %v647
    %v656 = vmul.f32 %v609, %v648
    %v657 = vmul.f32 %v611, %v649
    %v658 = vmul.f32 %v613, %v650
    %v659 = vmul.f32 %v615, %v651
    %v660 = vmul.f32 %v617, %v652
    %v661 = vmul.f32 %v619, %v653
    %v662 = vmul.f32 %v621, %v654
    %v663 = vmul.f32 %v623, %v655
    %v665 = vsel %vm575, %v656, 0
    %667 = vmatpush.msra.mxu0 0.0
    %668 = vmatpush.msra.mxu0 0.0
    %669 = vmatpush.msra.mxu0 0.0
    %670 = vmatpush.msra.mxu0 0.0
    %671 = vmatpush.msra.mxu0 0.0
    %672 = vmatpush.msra.mxu0 0.0
    %673 = vmatpush.msra.mxu0 0.0
    %674 = vmatpush.msra.mxu0 0.0
    %675 = vmatpush.msra.mxu0 0.0
    %676 = vmatpush.msra.mxu0 0.0
    %677 = vmatpush.msra.mxu0 0.0
    %678 = vmatpush.msra.mxu0 0.0
    %679 = vmatpush.msra.mxu0 0.0
    %680 = vmatpush.msra.mxu0 0.0
    %681 = vmatpush.msra.mxu0 0.0
    %682 = vmatpush.msra.mxu0 %v340
    %683 = vmatmul.f32.gmra.mxu0 %v665
    %v684 = vpop.f32.mrf.mxu0
    %v685 = vadd.f32 0.0, %v684
    %686 = vdwg.mxu0
    %v688 = vsel %vm575, %v657, 0
    %690 = vmatpush.msra.mxu0 0.0
    %691 = vmatpush.msra.mxu0 0.0
    %692 = vmatpush.msra.mxu0 0.0
    %693 = vmatpush.msra.mxu0 0.0
    %694 = vmatpush.msra.mxu0 0.0
    %695 = vmatpush.msra.mxu0 0.0
    %696 = vmatpush.msra.mxu0 0.0
    %697 = vmatpush.msra.mxu0 0.0
    %698 = vmatpush.msra.mxu0 0.0
    %699 = vmatpush.msra.mxu0 0.0
    %700 = vmatpush.msra.mxu0 0.0
    %701 = vmatpush.msra.mxu0 0.0
    %702 = vmatpush.msra.mxu0 0.0
    %703 = vmatpush.msra.mxu0 0.0
    %704 = vmatpush.msra.mxu0 0.0
    %705 = vmatpush.msra.mxu0 %v365
    %706 = vmatmul.f32.gmra.mxu0 %v688
    %v707 = vpop.f32.mrf.mxu0
    %v708 = vadd.f32 0.0, %v707
    %709 = vdwg.mxu0
    %v711 = vsel %vm575, %v658, 0
    %713 = vmatpush.msra.mxu0 0.0
    %714 = vmatpush.msra.mxu0 0.0
    %715 = vmatpush.msra.mxu0 0.0
    %716 = vmatpush.msra.mxu0 0.0
    %717 = vmatpush.msra.mxu0 0.0
    %718 = vmatpush.msra.mxu0 0.0
    %719 = vmatpush.msra.mxu0 0.0
    %720 = vmatpush.msra.mxu0 0.0
    %721 = vmatpush.msra.mxu0 0.0
    %722 = vmatpush.msra.mxu0 0.0
    %723 = vmatpush.msra.mxu0 0.0
    %724 = vmatpush.msra.mxu0 0.0
    %725 = vmatpush.msra.mxu0 0.0
    %726 = vmatpush.msra.mxu0 0.0
    %727 = vmatpush.msra.mxu0 0.0
    %728 = vmatpush.msra.mxu0 %v368
    %729 = vmatmul.f32.gmra.mxu0 %v711
    %v730 = vpop.f32.mrf.mxu0
    %v731 = vadd.f32 0.0, %v730
    %732 = vdwg.mxu0
    %v734 = vsel %vm575, %v659, 0
    %736 = vmatpush.msra.mxu0 0.0
    %737 = vmatpush.msra.mxu0 0.0
    %738 = vmatpush.msra.mxu0 0.0
    %739 = vmatpush.msra.mxu0 0.0
    %740 = vmatpush.msra.mxu0 0.0
    %741 = vmatpush.msra.mxu0 0.0
    %742 = vmatpush.msra.mxu0 0.0
    %743 = vmatpush.msra.mxu0 0.0
    %744 = vmatpush.msra.mxu0 0.0
    %745 = vmatpush.msra.mxu0 0.0
    %746 = vmatpush.msra.mxu0 0.0
    %747 = vmatpush.msra.mxu0 0.0
    %748 = vmatpush.msra.mxu0 0.0
    %749 = vmatpush.msra.mxu0 0.0
    %750 = vmatpush.msra.mxu0 0.0
    %751 = vmatpush.msra.mxu0 %v371
    %752 = vmatmul.f32.gmra.mxu0 %v734
    %v753 = vpop.f32.mrf.mxu0
    %v754 = vadd.f32 0.0, %v753
    %755 = vdwg.mxu0
    %v757 = vsel %vm575, %v660, 0
    %759 = vmatpush.msra.mxu0 0.0
    %760 = vmatpush.msra.mxu0 0.0
    %761 = vmatpush.msra.mxu0 0.0
    %762 = vmatpush.msra.mxu0 0.0
    %763 = vmatpush.msra.mxu0 0.0
    %764 = vmatpush.msra.mxu0 0.0
    %765 = vmatpush.msra.mxu0 0.0
    %766 = vmatpush.msra.mxu0 0.0
    %767 = vmatpush.msra.mxu0 0.0
    %768 = vmatpush.msra.mxu0 0.0
    %769 = vmatpush.msra.mxu0 0.0
    %770 = vmatpush.msra.mxu0 0.0
    %771 = vmatpush.msra.mxu0 0.0
    %772 = vmatpush.msra.mxu0 0.0
    %773 = vmatpush.msra.mxu0 0.0
    %774 = vmatpush.msra.mxu0 %v341
    %775 = vmatmul.f32.gmra.mxu0 %v757
    %v776 = vpop.f32.mrf.mxu0
    %v777 = vadd.f32 0.0, %v776
    %778 = vdwg.mxu0
    %v780 = vsel %vm575, %v661, 0
    %782 = vmatpush.msra.mxu0 0.0
    %783 = vmatpush.msra.mxu0 0.0
    %784 = vmatpush.msra.mxu0 0.0
    %785 = vmatpush.msra.mxu0 0.0
    %786 = vmatpush.msra.mxu0 0.0
    %787 = vmatpush.msra.mxu0 0.0
    %788 = vmatpush.msra.mxu0 0.0
    %789 = vmatpush.msra.mxu0 0.0
    %790 = vmatpush.msra.mxu0 0.0
    %791 = vmatpush.msra.mxu0 0.0
    %792 = vmatpush.msra.mxu0 0.0
    %793 = vmatpush.msra.mxu0 0.0
    %794 = vmatpush.msra.mxu0 0.0
    %795 = vmatpush.msra.mxu0 0.0
    %796 = vmatpush.msra.mxu0 0.0
    %797 = vmatpush.msra.mxu0 %v375
    %798 = vmatmul.f32.gmra.mxu0 %v780
    %v799 = vpop.f32.mrf.mxu0
    %v800 = vadd.f32 0.0, %v799
    %801 = vdwg.mxu0
    %v803 = vsel %vm575, %v662, 0
    %805 = vmatpush.msra.mxu0 0.0
    %806 = vmatpush.msra.mxu0 0.0
    %807 = vmatpush.msra.mxu0 0.0
    %808 = vmatpush.msra.mxu0 0.0
    %809 = vmatpush.msra.mxu0 0.0
    %810 = vmatpush.msra.mxu0 0.0
    %811 = vmatpush.msra.mxu0 0.0
    %812 = vmatpush.msra.mxu0 0.0
    %813 = vmatpush.msra.mxu0 0.0
    %814 = vmatpush.msra.mxu0 0.0
    %815 = vmatpush.msra.mxu0 0.0
    %816 = vmatpush.msra.mxu0 0.0
    %817 = vmatpush.msra.mxu0 0.0
    %818 = vmatpush.msra.mxu0 0.0
    %819 = vmatpush.msra.mxu0 0.0
    %820 = vmatpush.msra.mxu0 %v378
    %821 = vmatmul.f32.gmra.mxu0 %v803
    %v822 = vpop.f32.mrf.mxu0
    %v823 = vadd.f32 0.0, %v822
    %824 = vdwg.mxu0
    %v826 = vsel %vm575, %v663, 0
    %828 = vmatpush.msra.mxu0 0.0
    %829 = vmatpush.msra.mxu0 0.0
    %830 = vmatpush.msra.mxu0 0.0
    %831 = vmatpush.msra.mxu0 0.0
    %832 = vmatpush.msra.mxu0 0.0
    %833 = vmatpush.msra.mxu0 0.0
    %834 = vmatpush.msra.mxu0 0.0
    %835 = vmatpush.msra.mxu0 0.0
    %836 = vmatpush.msra.mxu0 0.0
    %837 = vmatpush.msra.mxu0 0.0
    %838 = vmatpush.msra.mxu0 0.0
    %839 = vmatpush.msra.mxu0 0.0
    %840 = vmatpush.msra.mxu0 0.0
    %841 = vmatpush.msra.mxu0 0.0
    %842 = vmatpush.msra.mxu0 0.0
    %843 = vmatpush.msra.mxu0 %v381
    %844 = vmatmul.f32.gmra.mxu0 %v826
    %v845 = vpop.f32.mrf.mxu0
    %v846 = vadd.f32 0.0, %v845
    %847 = vdwg.mxu0
    %849 = vrot.lane.b32.xlu0 %v708, 32
    %v850 = vpop.permute.xlu0 %849
    %853 = vrot.lane.b32.xlu0 %v731, 64
    %v854 = vpop.permute.xlu0 %853
    %857 = vrot.lane.b32.xlu0 %v754, 96
    %v858 = vpop.permute.xlu0 %857
    %v860 = vsel %vm184, %v685, %v850
    %vm861 = vcmask 523264
    %v862 = vsel %vm861, %v860, %v854
    %vm863 = vcmask 785408
    %v864 = vsel %vm863, %v862, %v858
    %866 = vrot.lane.b32.xlu0 %v800, 32
    %v867 = vpop.permute.xlu0 %866
    %870 = vrot.lane.b32.xlu0 %v823, 64
    %v871 = vpop.permute.xlu0 %870
    %874 = vrot.lane.b32.xlu0 %v846, 96
    %v875 = vpop.permute.xlu0 %874
    %v877 = vsel %vm184, %v777, %v867
    %v878 = vsel %vm861, %v877, %v871
    %v879 = vsel %vm863, %v878, %v875
    %v880 = vperm.slane %v112, 6
    %881 = vmatpush.msra.mxu0 %v176
    %882 = vmatpush.msra.mxu0 %v172
    %883 = vmatpush.msra.mxu0 %v168
    %884 = vmatpush.msra.mxu0 %v164
    %885 = vmatpush.msra.mxu0 %v160
    %886 = vmatpush.msra.mxu0 %v156
    %887 = vmatpush.msra.mxu0 %v152
    %888 = vmatpush.msra.mxu0 %v148
    %889 = vmatpush.msra.mxu0 %v144
    %890 = vmatpush.msra.mxu0 %v140
    %891 = vmatpush.msra.mxu0 %v136
    %892 = vmatpush.msra.mxu0 %v132
    %893 = vmatpush.msra.mxu0 %v128
    %894 = vmatpush.msra.mxu0 %v124
    %895 = vmatpush.msra.mxu0 %v120
    %896 = vmatpush.msra.mxu0 %v116
    %897 = vmatmul.f32.gmra.mxu0 %v864
    %v898 = vpop.f32.mrf.mxu0
    %v899 = vadd.f32 %v880, %v898
    %900 = vmatmul.f32.gmra.mxu0 %v879
    %v901 = vpop.f32.mrf.mxu0
    %v902 = vadd.f32 %v880, %v901
    %903 = vdwg.mxu0
    %904 = vst [vmem:[#allocation13] sm:$0xff] %v899
    %905 = vst [vmem:[#allocation13 + $0x8] sm:$0xff] %v902
    // Predicated region
    $region50: #{tpu_custom_call.1} parent=1 // pred_check
      _
    $region51: #{tpu_custom_call.1} parent=1 // pred_check_branch
      %907 = sbr.rel (0) target = $region53
    $region52: #{tpu_custom_call.1} parent=1 // pred_region
      %909 = vsyncadd [#allocation4], 0
      %s910 = sshll.u32 [#allocation13], 4
      %s911 = int_to_ptr.vmem [resolvable:$true] %s910
      %s912 = sshll.u32 %s6, 4
      %s913 = int_to_ptr.hbm [resolvable:$true] %s912
      %918 = dma.vmem_to_hbm [thread:$0]  %s911, 256, %s913, [#allocation4], 128, 128, 8
    $region53: #{tpu_custom_call.1} parent=1 // pred_fallthru
      _
    // Predicated region
    $region54: #{tpu_custom_call.1} parent=1 // pred_check
      _
    $region55: #{tpu_custom_call.1} parent=1 // pred_check_branch
      %920 = sbr.rel (0) target = $region57
    $region56: #{tpu_custom_call.1} parent=1 // pred_region
      %922 = dma.done [#allocation4], 256
    $region57: #{tpu_custom_call.1} parent=1 // pred_fallthru
      _
    %923 = vsyncpa [#allocation3], 1
    %924 = vsyncpa [#allocation6], 1
    %925 = vsyncpa [#allocation9], 1
    %926 = vsyncpa [#allocation12], 1
    %927 = vsyncpa [#allocation4], 1

</llo_original>
